<compile_context>
chip_gen: v7x
topology: tpu7x:2x2x1
jax: 0.10.0
libtpu: 0.0.40
codegen_flags: <defaults>
</compile_context>

<pallas_src>
import jax
import jax.numpy as jnp
from jax.experimental import pallas as pl
from jax.experimental.pallas import tpu as pltpu


def _round_up(x, m):
    return ((x + m - 1) // m) * m


def _fused_embed_kernel(z_ref, wf_ref, bias_ref, o_ref):
    # z_ref   : (m_tile, z_dim)   batched embedding vectors
    # wf_ref  : (z_dim, n_tile)   column slice of fused weight W2 . blockdiag(W1)
    # bias_ref: (1, n_tile)       column slice of fused bias (f32)
    # o_ref   : (m_tile, n_tile)  lane-dense output tile (f32)
    acc = jnp.dot(z_ref[...], wf_ref[...], preferred_element_type=jnp.float32)
    o_ref[...] = (acc + bias_ref[...]).astype(o_ref.dtype)


def embedding_forward(z_all, w1, b1, w2, b2, *, h, k, in_size, out_size,
                      f_size, z_dim, use_bf16=False):
    """Pallas-backed equivalent of Embedding.forward(hyper_net)."""
    n = h * k
    fout = out_size * f_size * f_size
    cols = in_size * fout                      # flat h_final length per z

    # ---- weight-only precompute: fuse the two affine layers ----------------
    # W_fused[z, i*fout + f] = sum_m w2[z, i*z_dim + m] * w1[m, f]
    w2r = w2.reshape(z_dim, in_size, z_dim)
    w_fused = jnp.einsum('zim,mf->zif', w2r, w1).reshape(z_dim, cols)
    # bias_fused[i*fout + f] = sum_m b2[i*z_dim + m] * w1[m, f] + b1[f]
    bias_fused = (b2.reshape(in_size, z_dim) @ w1 + b1[None, :]).reshape(cols)

    # ---- column (lane) tiling / padding -------------------------------------
    n_tile = 512 if cols >= 512 else _round_up(cols, 128)
    cols_pad = _round_up(cols, n_tile)
    if cols_pad != cols:
        w_fused = jnp.pad(w_fused, ((0, 0), (0, cols_pad - cols)))
        bias_fused = jnp.pad(bias_fused, (0, cols_pad - cols))
    bias_fused = bias_fused.reshape(1, cols_pad).astype(jnp.float32)

    # ---- row (M) tiling / padding: batch all embeddings into matmul M ------
    if n >= 256:
        m_tile = 256
    elif n >= 128:
        m_tile = 128
    else:
        m_tile = _round_up(max(n, 16), 16)     # sublane / bf16-pack friendly
    n_pad = _round_up(n, m_tile)
    z_pad = jnp.pad(z_all.astype(jnp.float32), ((0, n_pad - n), (0, 0)))

    in_dtype = jnp.bfloat16 if use_bf16 else jnp.float32
    z_pad = z_pad.astype(in_dtype)
    w_fused = w_fused.astype(in_dtype)

    grid = (n_pad // m_tile, cols_pad // n_tile)

    out_padded = pl.pallas_call(
        _fused_embed_kernel,
        out_shape=jax.ShapeDtypeStruct((n_pad, cols_pad), jnp.float32),
        grid_spec=pltpu.PrefetchScalarGridSpec(
            num_scalar_prefetch=0,
            grid=grid,
            in_specs=[
                pl.BlockSpec((m_tile, z_dim), lambda i, j: (i, 0)),
                pl.BlockSpec((z_dim, n_tile), lambda i, j: (0, j)),
                pl.BlockSpec((1, n_tile), lambda i, j: (0, j)),
            ],
            out_specs=pl.BlockSpec((m_tile, n_tile), lambda i, j: (i, j)),
        ),
        compiler_params=pltpu.CompilerParams(
            dimension_semantics=("parallel", "parallel")),
    )(z_pad, w_fused, bias_fused)

    # Strip padding.  Each row is the row-major flattening of (in_size, fout),
    # which PyTorch reinterprets (flat view) as (out_size, in_size, f, f).
    flat = out_padded[:n, :cols]
    kern = flat.reshape(h, k, out_size, in_size, f_size, f_size)
    # torch.cat over j along dim=1 and over i along dim=0:
    full = kern.transpose(0, 2, 1, 3, 4, 5).reshape(
        h * out_size, k * in_size, f_size, f_size)
    return full


def embedding_reference(z_all, w1, b1, w2, b2, *, h, k, in_size, out_size,
                        f_size, z_dim):
    """Pure-JAX mirror of the PyTorch module, for correctness checking."""
    ww = []
    for i in range(h):
        row = []
        for j in range(k):
            z = z_all[i * k + j]
            h_in = (z @ w2 + b2).reshape(in_size, z_dim)
            h_fin = h_in @ w1 + b1
            row.append(h_fin.reshape(out_size, in_size, f_size, f_size))
        ww.append(jnp.concatenate(row, axis=1))
    return jnp.concatenate(ww, axis=0)


if __name__ == "__main__":
    # Small, deterministic configuration.
    h, k = 2, 2              # z_num
    z_dim = 32
    in_size, out_size, f_size = 4, 4, 3

    key = jax.random.PRNGKey(0)
    kz, kw1, kb1, kw2, kb2 = jax.random.split(key, 5)

    # Embedding parameters: h*k vectors, torch.fmod(randn(z_dim), 2)-style init.
    z_all = jnp.fmod(
        jax.random.normal(kz, (h * k, z_dim), dtype=jnp.float32), 2.0)

    # Hyper-network parameters (same init recipe).
    fout = out_size * f_size * f_size
    w1 = jnp.fmod(jax.random.normal(kw1, (z_dim, fout), jnp.float32), 2.0)
    b1 = jnp.fmod(jax.random.normal(kb1, (fout,), jnp.float32), 2.0)
    w2 = jnp.fmod(
        jax.random.normal(kw2, (z_dim, in_size * z_dim), jnp.float32), 2.0)
    b2 = jnp.fmod(
        jax.random.normal(kb2, (in_size * z_dim,), jnp.float32), 2.0)

    cfg = dict(h=h, k=k, in_size=in_size, out_size=out_size,
               f_size=f_size, z_dim=z_dim)

    ref = embedding_reference(z_all, w1, b1, w2, b2, **cfg)

    # f32 path: bit-accurate (up to f32 associativity) against the reference.
    out = embedding_forward(z_all, w1, b1, w2, b2, use_bf16=False, **cfg)
    out = jax.block_until_ready(out)
    assert out.shape == (h * out_size, k * in_size, f_size, f_size), out.shape
    assert jnp.allclose(out, ref, atol=1e-4, rtol=1e-4), "mismatch vs reference"

    # bf16-operand path (f32 accumulation): looser tolerance.
    out_bf16 = embedding_forward(z_all, w1, b1, w2, b2, use_bf16=True, **cfg)
    out_bf16 = jax.block_until_ready(out_bf16)
    assert jnp.allclose(out_bf16, ref, atol=5e-1, rtol=3e-2), \
        "bf16 path mismatch vs reference"

    print("KERNEL_OK")
</pallas_src>

<mosaic_0001>
module attributes {stable_mosaic.version = 11 : i64} {
  func.func @_fused_embed_kernel(%arg0: i32, %arg1: i32, %arg2: memref<16x32xf32, #tpu.memory_space<vmem>>, %arg3: memref<32x256xf32, #tpu.memory_space<vmem>>, %arg4: memref<1x256xf32, #tpu.memory_space<vmem>>, %arg5: memref<16x256xf32, #tpu.memory_space<vmem>>) attributes {dimension_semantics = [#tpu.dimension_semantics<parallel>, #tpu.dimension_semantics<parallel>], iteration_bounds = array<i64: 1, 1>, scalar_prefetch = 0 : i64, scratch_operands = 0 : i64, tpu.core_type = #tpu.core_type<tc>, window_params = [{transform_indices = @transform_0, window_bounds = array<i64: 16, 32>}, {transform_indices = @transform_1, window_bounds = array<i64: 32, 256>}, {transform_indices = @transform_2, window_bounds = array<i64: 1, 256>}, {transform_indices = @transform_3, window_bounds = array<i64: 16, 256>}]} {
    %c0 = arith.constant 0 : index
    %c0_0 = arith.constant 0 : index
    %0 = vector.load %arg2[%c0, %c0_0] : memref<16x32xf32, #tpu.memory_space<vmem>>, vector<16x32xf32>
    %c0_1 = arith.constant 0 : index
    %c0_2 = arith.constant 0 : index
    %1 = vector.load %arg3[%c0_1, %c0_2] : memref<32x256xf32, #tpu.memory_space<vmem>>, vector<32x256xf32>
    %cst = arith.constant dense<0.000000e+00> : vector<16x256xf32>
    %2 = tpu.matmul %0, %1, %cst {dimension_numbers = #tpu.dot_dimension_numbers<[1], [0], [0], [1], [0, 0, 1, 1], [], []>} : vector<16x32xf32>, vector<32x256xf32>, vector<16x256xf32> -> vector<16x256xf32>
    %c0_3 = arith.constant 0 : index
    %c0_4 = arith.constant 0 : index
    %3 = vector.load %arg4[%c0_3, %c0_4] : memref<1x256xf32, #tpu.memory_space<vmem>>, vector<1x256xf32>
    %4 = vector.broadcast %3 : vector<1x256xf32> to vector<16x256xf32>
    %5 = arith.addf %2, %4 : vector<16x256xf32>
    %c0_5 = arith.constant 0 : index
    %c0_6 = arith.constant 0 : index
    %6 = vector.load %arg5[%c0_5, %c0_6] : memref<16x256xf32, #tpu.memory_space<vmem>>, vector<16x256xf32>
    tpu.vector_store %arg5[%c0_5, %c0_6], %5 {strides = array<i32>} : memref<16x256xf32, #tpu.memory_space<vmem>>, vector<16x256xf32>,
    return
  }
  func.func @transform_0(%arg0: i32, %arg1: i32) -> (i32, i32) {
    %c0_i32 = arith.constant 0 : i32
    %c0_i32_0 = arith.constant 0 : i32
    return %arg0, %c0_i32 : i32, i32
  }
  func.func @transform_1(%arg0: i32, %arg1: i32) -> (i32, i32) {
    %c0_i32 = arith.constant 0 : i32
    %c0_i32_0 = arith.constant 0 : i32
    return %c0_i32, %arg1 : i32, i32
  }
  func.func @transform_2(%arg0: i32, %arg1: i32) -> (i32, i32) {
    %c0_i32 = arith.constant 0 : i32
    %c0_i32_0 = arith.constant 0 : i32
    return %c0_i32, %arg1 : i32, i32
  }
  func.func @transform_3(%arg0: i32, %arg1: i32) -> (i32, i32) {
    %c0_i32 = arith.constant 0 : i32
    return %arg0, %arg1 : i32, i32
  }
}

</mosaic_0001>

<llo_original>
// kernel: tpu_custom_call.1
$region0: #{tpu_custom_call.1}
  #allocation0 [shape = 'u32[]', space=smem, size = 0x4, offset = 0x4, fixed_abs, tag = 'smem constant byte address 0x4 - core index']
  #allocation1 [shape = 'u32[144,128]{1,0:T(1,128)}', space=vmem, size = 0x12000, scoped, tag = 'internal scratch']
  %s0 = inlined_call_operand.hbm [shape: f32[16,32], index: 0, kind: input, shape index: {}]
  %s1 = inlined_call_operand.hbm [shape: f32[32,256], index: 1, kind: input, shape index: {}]
  %s2 = inlined_call_operand.vmem [shape: f32[1,256], index: 2, kind: input, shape index: {}]
  %s3 = inlined_call_operand.hbm [shape: f32[16,256], index: 3, kind: output, shape index: {}]
  %s4 = sld [smem:[#allocation0]]
  $region30: #{tpu_custom_call.1} parent=0
    _
  %s6 = ssub.s32 1, %s4
  %s7 = scalar_select 0, %s6, %s4
  $region1: #{tpu_custom_call.1} parent=0
    #allocation2 [shape = 'u8[8192]{0}', space=vmem, size = 0x2000, scoped, tag = 'input window, operand 0, single buffered']
    #allocation3 [shape = 's32[1]{0}', space=sflag, size = 0x4, scoped, tag = 'scoped memory for tpu_custom_call.1']
    #allocation4 [shape = 's32[1]{0}', space=sflag, size = 0x4, scoped, tag = 'scoped memory for tpu_custom_call.1']
    #allocation5 [shape = 'u8[32768]{0}', space=vmem, size = 0x8000, scoped, tag = 'input window, operand 1, single buffered']
    #allocation6 [shape = 's32[1]{0}', space=sflag, size = 0x4, scoped, tag = 'scoped memory for tpu_custom_call.1']
    #allocation7 [shape = 'u8[16384]{0}', space=vmem, size = 0x4000, scoped, tag = 'output window, operand 0, single buffered']
    %8 = vsyncpa [#allocation3], 0
    %9 = vsyncpa [#allocation6], 0
    %10 = vsyncpa [#allocation4], 0
    // Predicated region
    $region2: #{tpu_custom_call.1} parent=1 // pred_check
      _
    $region3: #{tpu_custom_call.1} parent=1 // pred_check_branch
      %12 = sbr.rel (0) target = $region5
    $region4: #{tpu_custom_call.1} parent=1 // pred_region
      %s14 = ssub.s32 256, 256
      %15 = vsyncadd [#allocation3], %s14
      %s16 = sshll.u32 [#allocation2], 4
      %s17 = int_to_ptr.vmem [resolvable:$true] %s16
      %22 = dma.hbm_to_vmem [thread:$0]  %s0, 256, %s17, [#allocation3], 128, 128, 8
    $region5: #{tpu_custom_call.1} parent=1 // pred_fallthru
      _
    // Predicated region
    $region6: #{tpu_custom_call.1} parent=1 // pred_check
      _
    $region7: #{tpu_custom_call.1} parent=1 // pred_check_branch
      %24 = sbr.rel (0) target = $region9
    $region8: #{tpu_custom_call.1} parent=1 // pred_region
      %s26 = ssub.s32 1024, 1024
      %27 = vsyncadd [#allocation6], %s26
      %s28 = sshll.u32 [#allocation5], 4
      %s29 = int_to_ptr.vmem [resolvable:$true] %s28
      %34 = dma.hbm_to_vmem [thread:$0]  %s1, 1024, %s29, [#allocation6], 256, 256, 16
    $region9: #{tpu_custom_call.1} parent=1 // pred_fallthru
      _
    // Predicated region
    $region10: #{tpu_custom_call.1} parent=1 // pred_check
      _
    $region11: #{tpu_custom_call.1} parent=1 // pred_check_branch
      %36 = sbr.rel (0) target = $region13
    $region12: #{tpu_custom_call.1} parent=1 // pred_region
      _
    $region13: #{tpu_custom_call.1} parent=1 // pred_fallthru
      _
    // Predicated region
    $region14: #{tpu_custom_call.1} parent=1 // pred_check
      _
    $region15: #{tpu_custom_call.1} parent=1 // pred_check_branch
      %38 = sbr.rel (0) target = $region17
    $region16: #{tpu_custom_call.1} parent=1 // pred_region
      %39 = dma.done [#allocation3], 256
    $region17: #{tpu_custom_call.1} parent=1 // pred_fallthru
      _
    // Predicated region
    $region18: #{tpu_custom_call.1} parent=1 // pred_check
      _
    $region19: #{tpu_custom_call.1} parent=1 // pred_check_branch
      %41 = sbr.rel (0) target = $region21
    $region20: #{tpu_custom_call.1} parent=1 // pred_region
      %42 = dma.done [#allocation6], 1024
    $region21: #{tpu_custom_call.1} parent=1 // pred_fallthru
      _
    %v43 = vld [vmem:[#allocation2] sm:$0xff]
    %v44 = vld [vmem:[#allocation2 + $0x8] sm:$0xff]
    %v45 = vld [vmem:[#allocation5] sm:$0xff]
    %v46 = vld [vmem:[#allocation5 + $0x8] sm:$0xff]
    %v47 = vld [vmem:[#allocation5 + $0x10] sm:$0xff]
    %v48 = vld [vmem:[#allocation5 + $0x18] sm:$0xff]
    %v49 = vld [vmem:[#allocation5 + $0x20] sm:$0xff]
    %v50 = vld [vmem:[#allocation5 + $0x28] sm:$0xff]
    %v51 = vld [vmem:[#allocation5 + $0x30] sm:$0xff]
    %v52 = vld [vmem:[#allocation5 + $0x38] sm:$0xff]
    %v53 = vld [vmem:[%s2] sm:$0x3]
    %v55 = vlaneseq
    %v56 = vshrl.u32 %v55, 7
    %v57 = vsub.s32 0, %v56
    %v58 = vrot.slane %v53, %v57
    %v59 = vlaneseq
    %v60 = vshrl.u32 %v59, 7
    %v61 = vsub.s32 1, %v60
    %v62 = vrot.slane %v53, %v61
    %vm65 = vcmask 261120
    %v67 = vsel %vm65, %v43, 0
    %v70 = vsel %vm65, %v44, 0
    %72 = vmatprep.subr.mxu0 %v46
    %73 = vmatpush1.msra.mxu0 %v45
    %74 = vmatprep.subr.mxu0 %v48
    %75 = vmatpush1.msra.mxu0 %v47
    %76 = vmatprep.subr.mxu0 %v50
    %77 = vmatpush1.msra.mxu0 %v49
    %78 = vmatprep.subr.mxu0 %v52
    %79 = vmatpush1.msra.mxu0 %v51
    %80 = vmatprep.subr.mxu0 0.0
    %81 = vmatpush1.msra.mxu0 0.0
    %82 = vmatprep.subr.mxu0 0.0
    %83 = vmatpush1.msra.mxu0 0.0
    %84 = vmatprep.subr.mxu0 0.0
    %85 = vmatpush1.msra.mxu0 0.0
    %86 = vmatprep.subr.mxu0 0.0
    %87 = vmatpush1.msra.mxu0 0.0
    %88 = vmatprep.subr.mxu0 0.0
    %89 = vmatpush1.msra.mxu0 0.0
    %90 = vmatprep.subr.mxu0 0.0
    %91 = vmatpush1.msra.mxu0 0.0
    %92 = vmatprep.subr.mxu0 0.0
    %93 = vmatpush1.msra.mxu0 0.0
    %94 = vmatprep.subr.mxu0 0.0
    %95 = vmatpush1.msra.mxu0 0.0
    %96 = vmatprep.subr.mxu0 0.0
    %97 = vmatpush1.msra.mxu0 0.0
    %98 = vmatprep.subr.mxu0 0.0
    %99 = vmatpush1.msra.mxu0 0.0
    %100 = vmatprep.subr.mxu0 0.0
    %101 = vmatpush1.msra.mxu0 0.0
    %102 = vmatprep.subr.mxu0 0.0
    %103 = vmatpush1.msra.mxu0 0.0
    %104 = vmatprep.subr.mxu0 0.0
    %105 = vmatpush1.msra.mxu0 0.0
    %106 = vmatprep.subr.mxu0 0.0
    %107 = vmatpush1.msra.mxu0 0.0
    %108 = vmatprep.subr.mxu0 0.0
    %109 = vmatpush1.msra.mxu0 0.0
    %110 = vmatprep.subr.mxu0 0.0
    %111 = vmatpush1.msra.mxu0 0.0
    %112 = vmatprep.subr.mxu0 0.0
    %113 = vmatpush1.msra.mxu0 0.0
    %114 = vmatprep.subr.mxu0 0.0
    %115 = vmatpush1.msra.mxu0 0.0
    %116 = vmatprep.subr.mxu0 0.0
    %117 = vmatpush1.msra.mxu0 0.0
    %118 = vmatprep.subr.mxu0 0.0
    %119 = vmatpush1.msra.mxu0 0.0
    %120 = vmatprep.subr.mxu0 0.0
    %121 = vmatpush1.msra.mxu0 0.0
    %122 = vmatprep.subr.mxu0 0.0
    %123 = vmatpush1.msra.mxu0 0.0
    %124 = vmatprep.subr.mxu0 0.0
    %125 = vmatpush1.msra.mxu0 0.0
    %126 = vmatprep.subr.mxu0 0.0
    %127 = vmatpush1.msra.mxu0 0.0
    %128 = vmatprep.subr.mxu0 0.0
    %129 = vmatpush1.msra.mxu0 0.0
    %130 = vmatprep.subr.mxu0 0.0
    %131 = vmatpush1.msra.mxu0 0.0
    %132 = vmatprep.subr.mxu0 0.0
    %133 = vmatpush1.msra.mxu0 0.0
    %134 = vmatprep.subr.mxu0 0.0
    %135 = vmatpush1.msra.mxu0 0.0
    %136 = vmatprep.mubr.f32.mxu0 0.0
    %137 = vmatmul.mubr.f32.gmra.mrb[0].mxu0 %v67
    %v138 = vpop.f32.mrb[0].mxu0
    %v139 = vadd.f32 %v58, %v138
    %v140 = vpop.f32.mrb[0].mxu0
    %v141 = vadd.f32 %v62, %v140
    %142 = vmatprep.mubr.f32.mxu0 0.0
    %143 = vmatmul.mubr.f32.gmra.mrb[0].mxu0 %v70
    %v144 = vpop.f32.mrb[0].mxu0
    %v145 = vadd.f32 %v58, %v144
    %v146 = vpop.f32.mrb[0].mxu0
    %v147 = vadd.f32 %v62, %v146
    %148 = vdwg.mxu0
    %149 = vst [vmem:[#allocation7] sm:$0xff] %v139
    %150 = vst [vmem:[#allocation7 + $0x8] sm:$0xff] %v141
    %151 = vst [vmem:[#allocation7 + $0x10] sm:$0xff] %v145
    %152 = vst [vmem:[#allocation7 + $0x18] sm:$0xff] %v147
    // Predicated region
    $region22: #{tpu_custom_call.1} parent=1 // pred_check
      _
    $region23: #{tpu_custom_call.1} parent=1 // pred_check_branch
      %154 = sbr.rel (0) target = $region25
    $region24: #{tpu_custom_call.1} parent=1 // pred_region
      %s156 = ssub.s32 512, 512
      %157 = vsyncadd [#allocation4], %s156
      %s158 = sshll.u32 [#allocation7], 4
      %s159 = int_to_ptr.vmem [resolvable:$true] %s158
      %164 = dma.vmem_to_hbm [thread:$0]  %s159, 512, %s3, [#allocation4], 256, 256, 16
    $region25: #{tpu_custom_call.1} parent=1 // pred_fallthru
      _
    // Predicated region
    $region26: #{tpu_custom_call.1} parent=1 // pred_check
      _
    $region27: #{tpu_custom_call.1} parent=1 // pred_check_branch
      %166 = sbr.rel (0) target = $region29
    $region28: #{tpu_custom_call.1} parent=1 // pred_region
      %167 = dma.done [#allocation4], 512
    $region29: #{tpu_custom_call.1} parent=1 // pred_fallthru
      _
    %168 = vsyncpa [#allocation3], 1
    %169 = vsyncpa [#allocation6], 1
    %170 = vsyncpa [#allocation4], 1

</llo_original>
